<compile_context>
chip_gen: v7x
topology: tpu7x:2x2x1
jax: 0.10.0
libtpu: 0.0.40
codegen_flags: <defaults>
</compile_context>

<pallas_src>
import jax
import jax.numpy as jnp
from jax import lax
from jax.experimental import pallas as pl
from jax.experimental.pallas import tpu as pltpu

BN_EPS = 1e-5


# ----------------------------- Pallas kernel ------------------------------- #
def _map_kernel(wq_ref, bq_ref, wk_ref, bk_ref, seq_ref, pe_ref,
                gamma_ref, beta_ref, out_ref):
    cblk = pl.program_id(0)
    cT, _, R = wq_ref.shape               # channels in this block, map_rank
    L = pe_ref.shape[1]
    B = out_ref.shape[0]
    LL = L * L
    inv_n = 1.0 / float(B * LL)

    seq2d = seq_ref[...]                   # (B*L, S) bf16, loaded once per step

    outs = []
    for lc in range(cT):                   # static unroll over the channel block
        c = cblk * cT + lc                 # global channel index (SMEM scalar reads)

        # q/k projections: two separate small matmuls (R < 128 -> no lane-slice),
        # bf16 operands, f32 accumulation on the MXU, bias added in f32.
        q = jnp.dot(seq2d, wq_ref[lc], preferred_element_type=jnp.float32) + bq_ref[lc]
        k = jnp.dot(seq2d, wk_ref[lc], preferred_element_type=jnp.float32) + bk_ref[lc]
        # (B*L, R) -> (B, L, R); free view when L is a multiple of 8 (f32 sublane).
        q = q.reshape(B, L, R).astype(jnp.bfloat16)
        k = k.reshape(B, L, R).astype(jnp.bfloat16)

        # keys @ queries^T -> (B, L, L); bf16 operands, f32 accumulation (MXU).
        m = jnp.einsum('bir,bjr->bij', k, q, preferred_element_type=jnp.float32)

        # Additive 2D positional encoding for this channel (f32).
        m = m + pe_ref[lc]

        # BatchNorm2d training-mode statistics (mean / biased var over B, H, W),
        # two-pass on the VMEM-resident slab (no E[x^2]-mean^2 cancellation).
        mean = jnp.sum(m) * inv_n
        centered = m - mean
        var = jnp.sum(centered * centered) * inv_n
        scale = lax.rsqrt(var + BN_EPS) * gamma_ref[c]
        y = centered * scale + beta_ref[c]

        outs.append(jnp.maximum(y, 0.0).reshape(B, LL))   # ReLU, flatten per channel

    # Single lane-dense store of the whole (B, cT*L*L) output block.
    out_ref[...] = jnp.concatenate(outs, axis=-1)


# ------------------------------- helpers ------------------------------------ #
def _pick_channel_block(C, LL, R):
    """Channels per grid step.

    Valid cT: divides C and gives a lane-dense store (cT*L*L % 128 == 0) or covers
    all channels.  Prefer >=2 grid steps (megacore 'parallel' sharding on multi-TC
    chips); among those, prefer the smallest cT that still fills the MXU
    (cT*2R >= 128), else the largest multi-step block (amortize step overhead).
    """
    valid = [ct for ct in range(1, C + 1)
             if C % ct == 0 and ((ct * LL) % 128 == 0 or ct == C)]
    multi = [ct for ct in valid if C // ct >= 2] or valid
    filled = [ct for ct in multi if ct * 2 * R >= 128]
    return min(filled) if filled else max(multi)


def _vmem_limit_bytes(B, L, S, R, cT):
    LL = L * L
    dbuf = 2  # Pallas double-buffers every auto-pipelined operand
    est = dbuf * (B * L * S * 2            # seq (bf16)
                  + 2 * cT * S * R * 2     # Wq, Wk (bf16)
                  + 2 * cT * R * 4         # bq, bk (f32)
                  + cT * LL * 4            # pe (f32)
                  + B * cT * LL * 4)       # out (f32)
    est += cT * (3 * B * LL + 4 * B * L * R) * 4   # in-kernel temps (m, centered, y, q, k)
    # Generous headroom for compiler scratch, capped below physical VMEM on every
    # current chip (v7x has 64 MiB per TensorCore).
    return int(min(64 * 2 ** 20, max(32 * 2 ** 20, 4 * est)))


# ------------------------------- wrapper ------------------------------------ #
def map_forward(seq, wq, bq, wk, bk, pe, gamma, beta):
    B, L, S = seq.shape
    C, _, R = wq.shape
    LL = L * L

    cT = _pick_channel_block(C, LL, R)
    grid = (C // cT,)

    # Pre-flatten seq and feed the MXU bf16 (halves seq / weight HBM reads too).
    seq_bf16 = seq.reshape(B * L, S).astype(jnp.bfloat16)
    wq_bf16 = wq.astype(jnp.bfloat16)
    wk_bf16 = wk.astype(jnp.bfloat16)

    # Output in (B, C, L*L) memory layout, flattened so the out-block's last dim
    # is a 128-multiple (lane-dense stores, no post-kernel transpose).
    out_flat = pl.pallas_call(
        _map_kernel,
        out_shape=jax.ShapeDtypeStruct((B, C * LL), jnp.float32),
        grid_spec=pltpu.PrefetchScalarGridSpec(
            num_scalar_prefetch=0,
            grid=grid,
            in_specs=[
                pl.BlockSpec((cT, S, R), lambda i: (i, 0, 0)),      # Wq  (bf16)
                pl.BlockSpec((cT, 1, R), lambda i: (i, 0, 0)),      # bq  (f32)
                pl.BlockSpec((cT, S, R), lambda i: (i, 0, 0)),      # Wk  (bf16)
                pl.BlockSpec((cT, 1, R), lambda i: (i, 0, 0)),      # bk  (f32)
                pl.BlockSpec((B * L, S), lambda i: (0, 0)),         # seq (grid-invariant)
                pl.BlockSpec((cT, L, L), lambda i: (i, 0, 0)),      # pe  (f32)
                pl.BlockSpec(memory_space=pltpu.MemorySpace.SMEM),  # gamma (C,)
                pl.BlockSpec(memory_space=pltpu.MemorySpace.SMEM),  # beta  (C,)
            ],
            out_specs=pl.BlockSpec((B, cT * LL), lambda i: (0, i)),
        ),
        compiler_params=pltpu.CompilerParams(
            dimension_semantics=("parallel",),
            vmem_limit_bytes=_vmem_limit_bytes(B, L, S, R, cT)),
    )(wq_bf16, bq, wk_bf16, bk, seq_bf16, pe, gamma, beta)

    # Free reshape back to NCHW (no transpose / extra HBM round trip).
    return out_flat.reshape(B, C, L, L)


# ----------------------- parameter / PE construction ------------------------ #
def positional_encoding_2d(channels, height, width):
    # TODO(synk): exact `modules.PositionalEncoding2D` source is unavailable;
    # substituting a standard additive 2D sinusoidal encoding (first half of the
    # channels encodes the column position, second half the row position).
    assert channels % 2 == 0
    c_half = channels // 2

    def pe_1d(n_ch, length):
        pos = jnp.arange(length, dtype=jnp.float32)[:, None]
        idx = jnp.arange(n_ch, dtype=jnp.float32)[None, :]
        div = jnp.power(10000.0, -2.0 * jnp.floor(idx / 2.0) / n_ch)
        ang = pos * div
        even = (jnp.arange(n_ch) % 2 == 0)[None, :]
        return jnp.where(even, jnp.sin(ang), jnp.cos(ang))      # (length, n_ch)

    pe_x = pe_1d(c_half, width).T[:, None, :]                    # (c_half, 1, W)
    pe_y = pe_1d(channels - c_half, height).T[:, :, None]        # (c_rest, H, 1)
    pe = jnp.concatenate([
        jnp.broadcast_to(pe_x, (c_half, height, width)),
        jnp.broadcast_to(pe_y, (channels - c_half, height, width)),
    ], axis=0)
    return pe.astype(jnp.float32)


def reference_forward(seq, wq, bq, wk, bk, pe, gamma, beta):
    """Pure-JAX f32 reference of the PyTorch forward (training-mode BN)."""
    q = jnp.einsum('bls,csr->bclr', seq, wq) + bq[None]          # (B, C, L, R)
    k = jnp.einsum('bls,csr->bclr', seq, wk) + bk[None]
    m = jnp.einsum('bcir,bcjr->bcij', k, q)                      # (B, C, L, L)
    m = m + pe[None]
    mean = jnp.mean(m, axis=(0, 2, 3), keepdims=True)
    var = jnp.mean((m - mean) ** 2, axis=(0, 2, 3), keepdims=True)
    m_hat = (m - mean) / jnp.sqrt(var + BN_EPS)
    out = m_hat * gamma[None, :, None, None] + beta[None, :, None, None]
    return jnp.maximum(out, 0.0)


# --------------------------------- main ------------------------------------- #
if __name__ == "__main__":
    B = 2
    seq_channels, map_channels, max_len, map_rank = 4, 4, 8, 16
    L = max_len                     # sequence length == max_len
    # activation = "ReLU" (chosen for the synthetic instantiation)

    key = jax.random.PRNGKey(0)
    k_seq, k_wq, k_bq, k_wk, k_bk = jax.random.split(key, 5)
    seq = jax.random.normal(k_seq, (B, L, seq_channels), dtype=jnp.float32)
    # Linear weights stored pre-transposed: (C, S, R); biases as (C, 1, R).
    wq = 0.3 * jax.random.normal(k_wq, (map_channels, seq_channels, map_rank), jnp.float32)
    bq = 0.1 * jax.random.normal(k_bq, (map_channels, 1, map_rank), jnp.float32)
    wk = 0.3 * jax.random.normal(k_wk, (map_channels, seq_channels, map_rank), jnp.float32)
    bk = 0.1 * jax.random.normal(k_bk, (map_channels, 1, map_rank), jnp.float32)
    gamma = jnp.ones((map_channels,), jnp.float32)   # BatchNorm2d default weight
    beta = jnp.zeros((map_channels,), jnp.float32)   # BatchNorm2d default bias
    pe = positional_encoding_2d(map_channels, L, L)

    out = jax.block_until_ready(map_forward(seq, wq, bq, wk, bk, pe, gamma, beta))

    # Kernel feeds the MXU bf16 operands; give the reference the same rounded
    # seq / projection weights, and use a bf16-appropriate tolerance (the
    # residual delta is the in-kernel bf16 cast of q/k before k @ q^T).
    rnd = lambda x: x.astype(jnp.bfloat16).astype(jnp.float32)
    ref = reference_forward(rnd(seq), rnd(wq), bq, rnd(wk), bk, pe, gamma, beta)

    assert out.shape == (B, map_channels, L, L), out.shape
    max_err = float(jnp.max(jnp.abs(out - ref)))
    assert jnp.allclose(out, ref, atol=3e-2, rtol=3e-2), max_err
    print("KERNEL_OK")
</pallas_src>

<mosaic_0001>
module attributes {stable_mosaic.version = 11 : i64} {
  func.func @_map_kernel(%arg0: i32, %arg1: memref<2x4x16xbf16, #tpu.memory_space<vmem>>, %arg2: memref<2x1x16xf32, #tpu.memory_space<vmem>>, %arg3: memref<2x4x16xbf16, #tpu.memory_space<vmem>>, %arg4: memref<2x1x16xf32, #tpu.memory_space<vmem>>, %arg5: memref<16x4xbf16, #tpu.memory_space<vmem>>, %arg6: memref<2x8x8xf32, #tpu.memory_space<vmem>>, %arg7: memref<4xf32, #tpu.memory_space<smem>>, %arg8: memref<4xf32, #tpu.memory_space<smem>>, %arg9: memref<2x128xf32, #tpu.memory_space<vmem>>) attributes {dimension_semantics = [#tpu.dimension_semantics<parallel>], iteration_bounds = array<i64: 2>, scalar_prefetch = 0 : i64, scratch_operands = 0 : i64, tpu.core_type = #tpu.core_type<tc>, window_params = [{transform_indices = @transform_0, window_bounds = array<i64: 2, 4, 16>}, {transform_indices = @transform_1, window_bounds = array<i64: 2, 1, 16>}, {transform_indices = @transform_2, window_bounds = array<i64: 2, 4, 16>}, {transform_indices = @transform_3, window_bounds = array<i64: 2, 1, 16>}, {pipeline_mode = #tpu.pipeline_mode<synchronous>, transform_indices = @transform_4, window_bounds = array<i64: 16, 4>}, {transform_indices = @transform_5, window_bounds = array<i64: 2, 8, 8>}, {transform_indices = @transform_6, window_bounds = array<i64: 4>}, {transform_indices = @transform_7, window_bounds = array<i64: 4>}, {transform_indices = @transform_8, window_bounds = array<i64: 2, 128>}]} {
    %c0 = arith.constant 0 : index
    %c0_0 = arith.constant 0 : index
    %0 = vector.load %arg5[%c0, %c0_0] : memref<16x4xbf16, #tpu.memory_space<vmem>>, vector<16x4xbf16>
    %c2_i32 = arith.constant 2 : i32
    %1 = arith.muli %arg0, %c2_i32 : i32
    %c0_i32 = arith.constant 0 : i32
    %2 = arith.addi %1, %c0_i32 : i32
    %c0_1 = arith.constant 0 : index
    %c0_2 = arith.constant 0 : index
    %c0_3 = arith.constant 0 : index
    %3 = vector.load %arg1[%c0_1, %c0_2, %c0_3] : memref<2x4x16xbf16, #tpu.memory_space<vmem>>, vector<1x4x16xbf16>
    %4 = vector.shape_cast %3 : vector<1x4x16xbf16> to vector<4x16xbf16>
    %cst = arith.constant dense<0.000000e+00> : vector<16x16xf32>
    %5 = tpu.matmul %0, %4, %cst {dimension_numbers = #tpu.dot_dimension_numbers<[1], [0], [0], [1], [0, 0, 1, 1], [], []>} : vector<16x4xbf16>, vector<4x16xbf16>, vector<16x16xf32> -> vector<16x16xf32>
    %c0_4 = arith.constant 0 : index
    %c0_5 = arith.constant 0 : index
    %c0_6 = arith.constant 0 : index
    %6 = vector.load %arg2[%c0_4, %c0_5, %c0_6] : memref<2x1x16xf32, #tpu.memory_space<vmem>>, vector<1x1x16xf32>
    %7 = vector.shape_cast %6 : vector<1x1x16xf32> to vector<1x16xf32>
    %8 = vector.broadcast %7 : vector<1x16xf32> to vector<16x16xf32>
    %9 = arith.addf %5, %8 : vector<16x16xf32>
    %c0_7 = arith.constant 0 : index
    %c0_8 = arith.constant 0 : index
    %c0_9 = arith.constant 0 : index
    %10 = vector.load %arg3[%c0_7, %c0_8, %c0_9] : memref<2x4x16xbf16, #tpu.memory_space<vmem>>, vector<1x4x16xbf16>
    %11 = vector.shape_cast %10 : vector<1x4x16xbf16> to vector<4x16xbf16>
    %cst_10 = arith.constant dense<0.000000e+00> : vector<16x16xf32>
    %12 = tpu.matmul %0, %11, %cst_10 {dimension_numbers = #tpu.dot_dimension_numbers<[1], [0], [0], [1], [0, 0, 1, 1], [], []>} : vector<16x4xbf16>, vector<4x16xbf16>, vector<16x16xf32> -> vector<16x16xf32>
    %c0_11 = arith.constant 0 : index
    %c0_12 = arith.constant 0 : index
    %c0_13 = arith.constant 0 : index
    %13 = vector.load %arg4[%c0_11, %c0_12, %c0_13] : memref<2x1x16xf32, #tpu.memory_space<vmem>>, vector<1x1x16xf32>
    %14 = vector.shape_cast %13 : vector<1x1x16xf32> to vector<1x16xf32>
    %15 = vector.broadcast %14 : vector<1x16xf32> to vector<16x16xf32>
    %16 = arith.addf %12, %15 : vector<16x16xf32>
    %17 = vector.shape_cast %9 : vector<16x16xf32> to vector<2x8x16xf32>
    %18 = arith.truncf %17 : vector<2x8x16xf32> to vector<2x8x16xbf16>
    %19 = vector.shape_cast %16 : vector<16x16xf32> to vector<2x8x16xf32>
    %20 = arith.truncf %19 : vector<2x8x16xf32> to vector<2x8x16xbf16>
    "tpu.trace_start"() <{level = 10 : i32, message = "bir,bjr->bij"}> : () -> ()
    %cst_14 = arith.constant dense<0.000000e+00> : vector<2x8x8xf32>
    %21 = tpu.matmul %20, %18, %cst_14 {dimension_numbers = #tpu.dot_dimension_numbers<[2], [2], [1], [1], [0, 0, 0, 1, 1, 1], [0], [0]>} : vector<2x8x16xbf16>, vector<2x8x16xbf16>, vector<2x8x8xf32> -> vector<2x8x8xf32>
    "tpu.trace_stop"() : () -> ()
    %c0_15 = arith.constant 0 : index
    %c0_16 = arith.constant 0 : index
    %c0_17 = arith.constant 0 : index
    %22 = vector.load %arg6[%c0_15, %c0_16, %c0_17] : memref<2x8x8xf32, #tpu.memory_space<vmem>>, vector<1x8x8xf32>
    %23 = vector.shape_cast %22 : vector<1x8x8xf32> to vector<8x8xf32>
    %24 = vector.shape_cast %23 : vector<8x8xf32> to vector<1x8x8xf32>
    %25 = vector.broadcast %24 : vector<1x8x8xf32> to vector<2x8x8xf32>
    %26 = arith.addf %21, %25 : vector<2x8x8xf32>
    %27 = vector.shape_cast %26 : vector<2x8x8xf32> to vector<1x2x8x8xf32>
    %cst_18 = arith.constant dense<0.000000e+00> : vector<1xf32>
    %28 = vector.multi_reduction <add>, %27, %cst_18 [1, 2, 3] : vector<1x2x8x8xf32> to vector<1xf32>
    %29 = vector.shape_cast %28 : vector<1xf32> to vector<1x1x1x1xf32>
    %30 = vector.extract %29[0, 0, 0, 0] : f32 from vector<1x1x1x1xf32>
    %cst_19 = arith.constant 7.812500e-03 : f32
    %31 = arith.mulf %30, %cst_19 : f32
    %32 = vector.broadcast %31 : f32 to vector<2x8x8xf32>
    %33 = arith.subf %26, %32 : vector<2x8x8xf32>
    %34 = arith.mulf %33, %33 : vector<2x8x8xf32>
    %35 = vector.shape_cast %34 : vector<2x8x8xf32> to vector<1x2x8x8xf32>
    %cst_20 = arith.constant dense<0.000000e+00> : vector<1xf32>
    %36 = vector.multi_reduction <add>, %35, %cst_20 [1, 2, 3] : vector<1x2x8x8xf32> to vector<1xf32>
    %37 = vector.shape_cast %36 : vector<1xf32> to vector<1x1x1x1xf32>
    %38 = vector.extract %37[0, 0, 0, 0] : f32 from vector<1x1x1x1xf32>
    %cst_21 = arith.constant 7.812500e-03 : f32
    %39 = arith.mulf %38, %cst_21 : f32
    %cst_22 = arith.constant 9.99999974E-6 : f32
    %40 = arith.addf %39, %cst_22 : f32
    %41 = math.rsqrt %40 : f32
    %42 = arith.index_cast %2 : i32 to index
    %43 = memref.load %arg7[%42] : memref<4xf32, #tpu.memory_space<smem>>
    %44 = arith.mulf %41, %43 : f32
    %45 = vector.broadcast %44 : f32 to vector<2x8x8xf32>
    %46 = arith.mulf %33, %45 : vector<2x8x8xf32>
    %47 = arith.index_cast %2 : i32 to index
    %48 = memref.load %arg8[%47] : memref<4xf32, #tpu.memory_space<smem>>
    %49 = vector.broadcast %48 : f32 to vector<2x8x8xf32>
    %50 = arith.addf %46, %49 : vector<2x8x8xf32>
    %cst_23 = arith.constant 0.000000e+00 : f32
    %51 = vector.broadcast %cst_23 : f32 to vector<2x8x8xf32>
    %52 = arith.maximumf %50, %51 : vector<2x8x8xf32>
    %53 = vector.shape_cast %52 : vector<2x8x8xf32> to vector<2x64xf32>
    %c2_i32_24 = arith.constant 2 : i32
    %54 = arith.muli %arg0, %c2_i32_24 : i32
    %c1_i32 = arith.constant 1 : i32
    %55 = arith.addi %54, %c1_i32 : i32
    %c1 = arith.constant 1 : index
    %c0_25 = arith.constant 0 : index
    %c0_26 = arith.constant 0 : index
    %56 = vector.load %arg1[%c1, %c0_25, %c0_26] : memref<2x4x16xbf16, #tpu.memory_space<vmem>>, vector<1x4x16xbf16>
    %57 = vector.shape_cast %56 : vector<1x4x16xbf16> to vector<4x16xbf16>
    %cst_27 = arith.constant dense<0.000000e+00> : vector<16x16xf32>
    %58 = tpu.matmul %0, %57, %cst_27 {dimension_numbers = #tpu.dot_dimension_numbers<[1], [0], [0], [1], [0, 0, 1, 1], [], []>} : vector<16x4xbf16>, vector<4x16xbf16>, vector<16x16xf32> -> vector<16x16xf32>
    %c1_28 = arith.constant 1 : index
    %c0_29 = arith.constant 0 : index
    %c0_30 = arith.constant 0 : index
    %59 = vector.load %arg2[%c1_28, %c0_29, %c0_30] : memref<2x1x16xf32, #tpu.memory_space<vmem>>, vector<1x1x16xf32>
    %60 = vector.shape_cast %59 : vector<1x1x16xf32> to vector<1x16xf32>
    %61 = vector.broadcast %60 : vector<1x16xf32> to vector<16x16xf32>
    %62 = arith.addf %58, %61 : vector<16x16xf32>
    %c1_31 = arith.constant 1 : index
    %c0_32 = arith.constant 0 : index
    %c0_33 = arith.constant 0 : index
    %63 = vector.load %arg3[%c1_31, %c0_32, %c0_33] : memref<2x4x16xbf16, #tpu.memory_space<vmem>>, vector<1x4x16xbf16>
    %64 = vector.shape_cast %63 : vector<1x4x16xbf16> to vector<4x16xbf16>
    %cst_34 = arith.constant dense<0.000000e+00> : vector<16x16xf32>
    %65 = tpu.matmul %0, %64, %cst_34 {dimension_numbers = #tpu.dot_dimension_numbers<[1], [0], [0], [1], [0, 0, 1, 1], [], []>} : vector<16x4xbf16>, vector<4x16xbf16>, vector<16x16xf32> -> vector<16x16xf32>
    %c1_35 = arith.constant 1 : index
    %c0_36 = arith.constant 0 : index
    %c0_37 = arith.constant 0 : index
    %66 = vector.load %arg4[%c1_35, %c0_36, %c0_37] : memref<2x1x16xf32, #tpu.memory_space<vmem>>, vector<1x1x16xf32>
    %67 = vector.shape_cast %66 : vector<1x1x16xf32> to vector<1x16xf32>
    %68 = vector.broadcast %67 : vector<1x16xf32> to vector<16x16xf32>
    %69 = arith.addf %65, %68 : vector<16x16xf32>
    %70 = vector.shape_cast %62 : vector<16x16xf32> to vector<2x8x16xf32>
    %71 = arith.truncf %70 : vector<2x8x16xf32> to vector<2x8x16xbf16>
    %72 = vector.shape_cast %69 : vector<16x16xf32> to vector<2x8x16xf32>
    %73 = arith.truncf %72 : vector<2x8x16xf32> to vector<2x8x16xbf16>
    "tpu.trace_start"() <{level = 10 : i32, message = "bir,bjr->bij"}> : () -> ()
    %cst_38 = arith.constant dense<0.000000e+00> : vector<2x8x8xf32>
    %74 = tpu.matmul %73, %71, %cst_38 {dimension_numbers = #tpu.dot_dimension_numbers<[2], [2], [1], [1], [0, 0, 0, 1, 1, 1], [0], [0]>} : vector<2x8x16xbf16>, vector<2x8x16xbf16>, vector<2x8x8xf32> -> vector<2x8x8xf32>
    "tpu.trace_stop"() : () -> ()
    %c1_39 = arith.constant 1 : index
    %c0_40 = arith.constant 0 : index
    %c0_41 = arith.constant 0 : index
    %75 = vector.load %arg6[%c1_39, %c0_40, %c0_41] : memref<2x8x8xf32, #tpu.memory_space<vmem>>, vector<1x8x8xf32>
    %76 = vector.shape_cast %75 : vector<1x8x8xf32> to vector<8x8xf32>
    %77 = vector.shape_cast %76 : vector<8x8xf32> to vector<1x8x8xf32>
    %78 = vector.broadcast %77 : vector<1x8x8xf32> to vector<2x8x8xf32>
    %79 = arith.addf %74, %78 : vector<2x8x8xf32>
    %80 = vector.shape_cast %79 : vector<2x8x8xf32> to vector<1x2x8x8xf32>
    %cst_42 = arith.constant dense<0.000000e+00> : vector<1xf32>
    %81 = vector.multi_reduction <add>, %80, %cst_42 [1, 2, 3] : vector<1x2x8x8xf32> to vector<1xf32>
    %82 = vector.shape_cast %81 : vector<1xf32> to vector<1x1x1x1xf32>
    %83 = vector.extract %82[0, 0, 0, 0] : f32 from vector<1x1x1x1xf32>
    %cst_43 = arith.constant 7.812500e-03 : f32
    %84 = arith.mulf %83, %cst_43 : f32
    %85 = vector.broadcast %84 : f32 to vector<2x8x8xf32>
    %86 = arith.subf %79, %85 : vector<2x8x8xf32>
    %87 = arith.mulf %86, %86 : vector<2x8x8xf32>
    %88 = vector.shape_cast %87 : vector<2x8x8xf32> to vector<1x2x8x8xf32>
    %cst_44 = arith.constant dense<0.000000e+00> : vector<1xf32>
    %89 = vector.multi_reduction <add>, %88, %cst_44 [1, 2, 3] : vector<1x2x8x8xf32> to vector<1xf32>
    %90 = vector.shape_cast %89 : vector<1xf32> to vector<1x1x1x1xf32>
    %91 = vector.extract %90[0, 0, 0, 0] : f32 from vector<1x1x1x1xf32>
    %cst_45 = arith.constant 7.812500e-03 : f32
    %92 = arith.mulf %91, %cst_45 : f32
    %cst_46 = arith.constant 9.99999974E-6 : f32
    %93 = arith.addf %92, %cst_46 : f32
    %94 = math.rsqrt %93 : f32
    %95 = arith.index_cast %55 : i32 to index
    %96 = memref.load %arg7[%95] : memref<4xf32, #tpu.memory_space<smem>>
    %97 = arith.mulf %94, %96 : f32
    %98 = vector.broadcast %97 : f32 to vector<2x8x8xf32>
    %99 = arith.mulf %86, %98 : vector<2x8x8xf32>
    %100 = arith.index_cast %55 : i32 to index
    %101 = memref.load %arg8[%100] : memref<4xf32, #tpu.memory_space<smem>>
    %102 = vector.broadcast %101 : f32 to vector<2x8x8xf32>
    %103 = arith.addf %99, %102 : vector<2x8x8xf32>
    %cst_47 = arith.constant 0.000000e+00 : f32
    %104 = vector.broadcast %cst_47 : f32 to vector<2x8x8xf32>
    %105 = arith.maximumf %103, %104 : vector<2x8x8xf32>
    %106 = vector.shape_cast %105 : vector<2x8x8xf32> to vector<2x64xf32>
    %107 = tpu.concatenate %53, %106 in 1 : vector<2x64xf32>, vector<2x64xf32> -> vector<2x128xf32>
    %c0_48 = arith.constant 0 : index
    %c0_49 = arith.constant 0 : index
    %108 = vector.load %arg9[%c0_48, %c0_49] : memref<2x128xf32, #tpu.memory_space<vmem>>, vector<2x128xf32>
    tpu.vector_store %arg9[%c0_48, %c0_49], %107 {strides = array<i32>} : memref<2x128xf32, #tpu.memory_space<vmem>>, vector<2x128xf32>,
    return
  }
  func.func @transform_0(%arg0: i32) -> (i32, i32, i32) {
    %c0_i32 = arith.constant 0 : i32
    %c0_i32_0 = arith.constant 0 : i32
    %c0_i32_1 = arith.constant 0 : i32
    return %arg0, %c0_i32, %c0_i32_0 : i32, i32, i32
  }
  func.func @transform_1(%arg0: i32) -> (i32, i32, i32) {
    %c0_i32 = arith.constant 0 : i32
    %c0_i32_0 = arith.constant 0 : i32
    %c0_i32_1 = arith.constant 0 : i32
    return %arg0, %c0_i32, %c0_i32_0 : i32, i32, i32
  }
  func.func @transform_2(%arg0: i32) -> (i32, i32, i32) {
    %c0_i32 = arith.constant 0 : i32
    %c0_i32_0 = arith.constant 0 : i32
    %c0_i32_1 = arith.constant 0 : i32
    return %arg0, %c0_i32, %c0_i32_0 : i32, i32, i32
  }
  func.func @transform_3(%arg0: i32) -> (i32, i32, i32) {
    %c0_i32 = arith.constant 0 : i32
    %c0_i32_0 = arith.constant 0 : i32
    %c0_i32_1 = arith.constant 0 : i32
    return %arg0, %c0_i32, %c0_i32_0 : i32, i32, i32
  }
  func.func @transform_4(%arg0: i32) -> (i32, i32) {
    %c0_i32 = arith.constant 0 : i32
    %c0_i32_0 = arith.constant 0 : i32
    %c0_i32_1 = arith.constant 0 : i32
    return %c0_i32, %c0_i32_0 : i32, i32
  }
  func.func @transform_5(%arg0: i32) -> (i32, i32, i32) {
    %c0_i32 = arith.constant 0 : i32
    %c0_i32_0 = arith.constant 0 : i32
    %c0_i32_1 = arith.constant 0 : i32
    return %arg0, %c0_i32, %c0_i32_0 : i32, i32, i32
  }
  func.func @transform_6(%arg0: i32) -> i32 {
    %c0_i32 = arith.constant 0 : i32
    %c0_i32_0 = arith.constant 0 : i32
    return %c0_i32 : i32
  }
  func.func @transform_7(%arg0: i32) -> i32 {
    %c0_i32 = arith.constant 0 : i32
    %c0_i32_0 = arith.constant 0 : i32
    return %c0_i32 : i32
  }
  func.func @transform_8(%arg0: i32) -> (i32, i32) {
    %c0_i32 = arith.constant 0 : i32
    %c0_i32_0 = arith.constant 0 : i32
    return %c0_i32, %arg0 : i32, i32
  }
}

</mosaic_0001>

<llo_original>
// kernel: tpu_custom_call.1
$region0: #{tpu_custom_call.1}
  #allocation0 [shape = 'u32[]', space=smem, size = 0x4, offset = 0x4, fixed_abs, tag = 'smem constant byte address 0x4 - core index']
  #allocation1 [shape = 'u32[144,128]{1,0:T(1,128)}', space=vmem, size = 0x12000, scoped, tag = 'internal scratch']
  %s0 = inlined_call_operand.vmem [shape: bf16[4,4,16], index: 0, kind: input, shape index: {}]
  %s1 = inlined_call_operand.hbm [shape: f32[4,1,16], index: 1, kind: input, shape index: {}]
  %s2 = inlined_call_operand.vmem [shape: bf16[4,4,16], index: 2, kind: input, shape index: {}]
  %s3 = inlined_call_operand.vmem [shape: f32[4,1,16], index: 3, kind: input, shape index: {}]
  %s4 = inlined_call_operand.vmem [shape: bf16[16,4], index: 4, kind: input, shape index: {}]
  %s5 = inlined_call_operand.hbm [shape: f32[4,8,8], index: 5, kind: input, shape index: {}]
  %s6 = inlined_call_operand.vmem [shape: f32[4], index: 6, kind: input, shape index: {}]
  %s7 = inlined_call_operand.vmem [shape: f32[4], index: 7, kind: input, shape index: {}]
  %s8 = inlined_call_operand.hbm [shape: f32[2,256], index: 8, kind: output, shape index: {}]
  %s9 = sld [smem:[#allocation0]]
  $region81: #{tpu_custom_call.1} parent=0
    _
  %s11 = ssub.s32 1, %s9
  %s12 = scalar_select 0, %s11, %s9
  $region1: #{tpu_custom_call.1} parent=0
    #allocation2 [shape = 'u8[2048]{0}', space=vmem, size = 0x800, scoped, tag = 'input window, operand 1']
    #allocation3 [shape = 's32[2]{0}', space=sflag, size = 0x8, scoped, tag = 'scoped memory for tpu_custom_call.1']
    #allocation4 [shape = 's32[2]{0}', space=sflag, size = 0x8, scoped, tag = 'scoped memory for tpu_custom_call.1']
    #allocation5 [shape = 's32[2]{0}', space=sflag, size = 0x8, scoped, tag = 'scoped memory for tpu_custom_call.1']
    #allocation6 [shape = 'u8[16384]{0}', space=vmem, size = 0x4000, scoped, tag = 'input window, operand 5']
    #allocation7 [shape = 's32[2]{0}', space=sflag, size = 0x8, scoped, tag = 'scoped memory for tpu_custom_call.1']
    #allocation8 [shape = 'u8[512]{0}', space=smem, size = 0x200, scoped, tag = 'input window, operand 6, single buffered']
    #allocation9 [shape = 'u8[512]{0}', space=smem, size = 0x200, scoped, tag = 'input window, operand 7, single buffered']
    #allocation10 [shape = 's32[1]{0}', space=sflag, size = 0x4, scoped, tag = 'scoped memory for tpu_custom_call.1']
    #allocation11 [shape = 'u8[2048]{0}', space=vmem, size = 0x800, scoped, tag = 'output window, operand 0']
    %13 = vsyncpa [#allocation3], 0
    %s14 = scalar_lea.sflag [#allocation3], 1
    %15 = vsyncpa %s14, 0
    %16 = vsyncpa [#allocation7], 0
    %s17 = scalar_lea.sflag [#allocation7], 1
    %18 = vsyncpa %s17, 0
    %19 = vsyncpa [#allocation5], 0
    %20 = vsyncpa [#allocation10], 0
    %21 = vsyncpa [#allocation4], 0
    %s22 = scalar_lea.sflag [#allocation4], 1
    %23 = vsyncpa %s22, 0
    loop: start=0, step=1, limit=4
    $region2: #{tpu_custom_call.1} parent=1 // loop_pre_header
      _
    $region3: #{tpu_custom_call.1} parent=1 // loop_header
      %s25 = sphi 0, %s29
      %p26 = scmp.ge.s32.totalorder %s25, 4
      %s35 = sphi 0, %s37
      %s38 = sphi 0, %s35
      %s39 = sphi 0, %s38
      %s55 = sphi 0, %s39
      %s61 = sphi 0, %s63
      %s64 = sphi 0, %s61
      %s65 = sphi 0, %s64
      %s81 = sphi 0, %s65
      %s87 = sphi 0, %s89
      %s90 = sphi 0, %s87
      %s91 = sphi 0, %s90
      %s107 = sphi 0, %s91
      %s113 = sphi 0, %s115
      %s116 = sphi 0, %s113
      %s117 = sphi 0, %s116
      %s133 = sphi 0, %s117
      %s137 = sphi 0, %s137
      %s139 = sphi 0, %s137
      %s140 = sphi 0, %s139
      %s154 = sphi 0, %s140
      %s160 = sphi 0, %s162
      %s163 = sphi 0, %s160
      %s164 = sphi 0, %s163
      %s180 = sphi 0, %s164
      %s184 = sphi 0, %s184
      %s186 = sphi 0, %s184
      %s187 = sphi 0, %s186
      %s201 = sphi 0, %s187
      %s205 = sphi 0, %s205
      %s207 = sphi 0, %s205
      %s208 = sphi 0, %s207
      %s222 = sphi 0, %s208
      %s228 = sphi 0, %s230
      %s231 = sphi 0, %s228
      %s232 = sphi 0, %s231
      %s248 = sphi 0, %s232
    $region4: #{tpu_custom_call.1} parent=1 // loop_header_branch
      %28 = sbr.rel (%p26) target = $region8
    $region5: #{tpu_custom_call.1} parent=1 // loop_body
      %s30 = ssub.s32 %s25, 1
      %s31 = ssub.s32 %s25, 2
      %s32 = sadd.s32 %s25, 1
      %s33 = ssub.s32 %s25, %s32
      %p34 = scmp.eq.s32.totalorder %s33, 0
      %s36 = sadd.s32 %s35, 1
      %s37 = scalar_select %p34, %s35, %s36
      %p40 = pneg %p34
      %p41 = scmp.eq.s32.totalorder %s25, 1
      %p42 = por %p40, %p41
      %p43 = scmp.ne.s32.totalorder %s35, %s38
      %p44 = scmp.eq.s32.totalorder %s25, 0
      %p45 = por %p43, %p44
      %p46 = scmp.ne.s32.totalorder %s35, %s38
      %p47 = scmp.eq.s32.totalorder %s30, 1
      %p48 = por %p46, %p47
      %p49 = scmp.ne.s32.totalorder %s38, %s39
      %p50 = scmp.eq.s32.totalorder %s30, 0
      %p51 = por %p49, %p50
      %p52 = scmp.ne.s32.totalorder %s38, %s39
      %p53 = scmp.eq.s32.totalorder %s31, 1
      %p54 = por %p52, %p53
      %p56 = scmp.ne.s32.totalorder %s39, %s55
      %p57 = scmp.eq.s32.totalorder %s31, 0
      %p58 = por %p56, %p57
      %s59 = ssub.s32 %s25, %s32
      %p60 = scmp.eq.s32.totalorder %s59, 0
      %s62 = sadd.s32 %s61, 1
      %s63 = scalar_select %p60, %s61, %s62
      %p66 = pneg %p60
      %p67 = scmp.eq.s32.totalorder %s25, 1
      %p68 = por %p66, %p67
      %p69 = scmp.ne.s32.totalorder %s61, %s64
      %p70 = scmp.eq.s32.totalorder %s25, 0
      %p71 = por %p69, %p70
      %p72 = scmp.ne.s32.totalorder %s61, %s64
      %p73 = scmp.eq.s32.totalorder %s30, 1
      %p74 = por %p72, %p73
      %p75 = scmp.ne.s32.totalorder %s64, %s65
      %p76 = scmp.eq.s32.totalorder %s30, 0
      %p77 = por %p75, %p76
      %p78 = scmp.ne.s32.totalorder %s64, %s65
      %p79 = scmp.eq.s32.totalorder %s31, 1
      %p80 = por %p78, %p79
      %p82 = scmp.ne.s32.totalorder %s65, %s81
      %p83 = scmp.eq.s32.totalorder %s31, 0
      %p84 = por %p82, %p83
      %s85 = ssub.s32 %s25, %s32
      %p86 = scmp.eq.s32.totalorder %s85, 0
      %s88 = sadd.s32 %s87, 1
      %s89 = scalar_select %p86, %s87, %s88
      %p92 = pneg %p86
      %p93 = scmp.eq.s32.totalorder %s25, 1
      %p94 = por %p92, %p93
      %p95 = scmp.ne.s32.totalorder %s87, %s90
      %p96 = scmp.eq.s32.totalorder %s25, 0
      %p97 = por %p95, %p96
      %p98 = scmp.ne.s32.totalorder %s87, %s90
      %p99 = scmp.eq.s32.totalorder %s30, 1
      %p100 = por %p98, %p99
      %p101 = scmp.ne.s32.totalorder %s90, %s91
      %p102 = scmp.eq.s32.totalorder %s30, 0
      %p103 = por %p101, %p102
      %p104 = scmp.ne.s32.totalorder %s90, %s91
      %p105 = scmp.eq.s32.totalorder %s31, 1
      %p106 = por %p104, %p105
      %p108 = scmp.ne.s32.totalorder %s91, %s107
      %p109 = scmp.eq.s32.totalorder %s31, 0
      %p110 = por %p108, %p109
      %s111 = ssub.s32 %s25, %s32
      %p112 = scmp.eq.s32.totalorder %s111, 0
      %s114 = sadd.s32 %s113, 1
      %s115 = scalar_select %p112, %s113, %s114
      %p118 = pneg %p112
      %p119 = scmp.eq.s32.totalorder %s25, 1
      %p120 = por %p118, %p119
      %p121 = scmp.ne.s32.totalorder %s113, %s116
      %p122 = scmp.eq.s32.totalorder %s25, 0
      %p123 = por %p121, %p122
      %p124 = scmp.ne.s32.totalorder %s113, %s116
      %p125 = scmp.eq.s32.totalorder %s30, 1
      %p126 = por %p124, %p125
      %p127 = scmp.ne.s32.totalorder %s116, %s117
      %p128 = scmp.eq.s32.totalorder %s30, 0
      %p129 = por %p127, %p128
      %p130 = scmp.ne.s32.totalorder %s116, %s117
      %p131 = scmp.eq.s32.totalorder %s31, 1
      %p132 = por %p130, %p131
      %p134 = scmp.ne.s32.totalorder %s117, %s133
      %p135 = scmp.eq.s32.totalorder %s31, 0
      %p136 = por %p134, %p135
      %s138 = sadd.s32 %s137, 1
      %p141 = scmp.eq.s32.totalorder %s25, 1
      %p142 = scmp.ne.s32.totalorder %s137, %s139
      %p143 = scmp.eq.s32.totalorder %s25, 0
      %p144 = por %p142, %p143
      %p145 = scmp.ne.s32.totalorder %s137, %s139
      %p146 = scmp.eq.s32.totalorder %s30, 1
      %p147 = por %p145, %p146
      %p148 = scmp.ne.s32.totalorder %s139, %s140
      %p149 = scmp.eq.s32.totalorder %s30, 0
      %p150 = por %p148, %p149
      %p151 = scmp.ne.s32.totalorder %s139, %s140
      %p152 = scmp.eq.s32.totalorder %s31, 1
      %p153 = por %p151, %p152
      %p155 = scmp.ne.s32.totalorder %s140, %s154
      %p156 = scmp.eq.s32.totalorder %s31, 0
      %p157 = por %p155, %p156
      %s158 = ssub.s32 %s25, %s32
      %p159 = scmp.eq.s32.totalorder %s158, 0
      %s161 = sadd.s32 %s160, 1
      %s162 = scalar_select %p159, %s160, %s161
      %p165 = pneg %p159
      %p166 = scmp.eq.s32.totalorder %s25, 1
      %p167 = por %p165, %p166
      %p168 = scmp.ne.s32.totalorder %s160, %s163
      %p169 = scmp.eq.s32.totalorder %s25, 0
      %p170 = por %p168, %p169
      %p171 = scmp.ne.s32.totalorder %s160, %s163
      %p172 = scmp.eq.s32.totalorder %s30, 1
      %p173 = por %p171, %p172
      %p174 = scmp.ne.s32.totalorder %s163, %s164
      %p175 = scmp.eq.s32.totalorder %s30, 0
      %p176 = por %p174, %p175
      %p177 = scmp.ne.s32.totalorder %s163, %s164
      %p178 = scmp.eq.s32.totalorder %s31, 1
      %p179 = por %p177, %p178
      %p181 = scmp.ne.s32.totalorder %s164, %s180
      %p182 = scmp.eq.s32.totalorder %s31, 0
      %p183 = por %p181, %p182
      %s185 = sadd.s32 %s184, 1
      %p188 = scmp.eq.s32.totalorder %s25, 1
      %p189 = scmp.ne.s32.totalorder %s184, %s186
      %p190 = scmp.eq.s32.totalorder %s25, 0
      %p191 = por %p189, %p190
      %p192 = scmp.ne.s32.totalorder %s184, %s186
      %p193 = scmp.eq.s32.totalorder %s30, 1
      %p194 = por %p192, %p193
      %p195 = scmp.ne.s32.totalorder %s186, %s187
      %p196 = scmp.eq.s32.totalorder %s30, 0
      %p197 = por %p195, %p196
      %p198 = scmp.ne.s32.totalorder %s186, %s187
      %p199 = scmp.eq.s32.totalorder %s31, 1
      %p200 = por %p198, %p199
      %p202 = scmp.ne.s32.totalorder %s187, %s201
      %p203 = scmp.eq.s32.totalorder %s31, 0
      %p204 = por %p202, %p203
      %s206 = sadd.s32 %s205, 1
      %p209 = scmp.eq.s32.totalorder %s25, 1
      %p210 = scmp.ne.s32.totalorder %s205, %s207
      %p211 = scmp.eq.s32.totalorder %s25, 0
      %p212 = por %p210, %p211
      %p213 = scmp.ne.s32.totalorder %s205, %s207
      %p214 = scmp.eq.s32.totalorder %s30, 1
      %p215 = por %p213, %p214
      %p216 = scmp.ne.s32.totalorder %s207, %s208
      %p217 = scmp.eq.s32.totalorder %s30, 0
      %p218 = por %p216, %p217
      %p219 = scmp.ne.s32.totalorder %s207, %s208
      %p220 = scmp.eq.s32.totalorder %s31, 1
      %p221 = por %p219, %p220
      %p223 = scmp.ne.s32.totalorder %s208, %s222
      %p224 = scmp.eq.s32.totalorder %s31, 0
      %p225 = por %p223, %p224
      %s226 = ssub.s32 %s25, %s32
      %p227 = scmp.eq.s32.totalorder %s226, 0
      %s229 = sadd.s32 %s228, 1
      %s230 = scalar_select %p227, %s228, %s229
      %p233 = pneg %p227
      %p234 = scmp.eq.s32.totalorder %s25, 1
      %p235 = por %p233, %p234
      %p236 = scmp.ne.s32.totalorder %s228, %s231
      %p237 = scmp.eq.s32.totalorder %s25, 0
      %p238 = por %p236, %p237
      %p239 = scmp.ne.s32.totalorder %s228, %s231
      %p240 = scmp.eq.s32.totalorder %s30, 1
      %p241 = por %p239, %p240
      %p242 = scmp.ne.s32.totalorder %s231, %s232
      %p243 = scmp.eq.s32.totalorder %s30, 0
      %p244 = por %p242, %p243
      %p245 = scmp.ne.s32.totalorder %s231, %s232
      %p246 = scmp.eq.s32.totalorder %s31, 1
      %p247 = por %p245, %p246
      %p249 = scmp.ne.s32.totalorder %s232, %s248
      %p250 = scmp.eq.s32.totalorder %s31, 0
      %p251 = por %p249, %p250
      %p252 = scmp.le.s32.totalorder 1, %s25
      %p253 = scmp.lt.s32.totalorder %s25, 3
      %p254 = pnand %p252, %p253
      %p255 = pneg %p254
      // Predicated region
      $region9: #{tpu_custom_call.1} parent=5 // pred_check
        _
      $region10: #{tpu_custom_call.1} parent=5 // pred_check_branch
        %257 = sbr.rel (%p254) target = $region12
      $region11: #{tpu_custom_call.1} parent=5 // pred_region
        %s258 = ssub.s32 %s25, 1
        // Predicated region
        $region13: #{tpu_custom_call.1} parent=11 // pred_check
          %p259 = pneg %p150
        $region14: #{tpu_custom_call.1} parent=11 // pred_check_branch
          %261 = sbr.rel (%p259) target = $region16
        $region15: #{tpu_custom_call.1} parent=11 // pred_region
          _
        $region16: #{tpu_custom_call.1} parent=11 // pred_fallthru
          _
        // Predicated region
        $region17: #{tpu_custom_call.1} parent=11 // pred_check
          %p262 = pneg %p197
        $region18: #{tpu_custom_call.1} parent=11 // pred_check_branch
          %264 = sbr.rel (%p262) target = $region20
        $region19: #{tpu_custom_call.1} parent=11 // pred_region
          %s266 = ssub.s32 16, 16
          %267 = vsyncadd [#allocation5], %s266
          %s269 = sshll.u32 %s6, 4
          %s270 = int_to_ptr.vmem [resolvable:$true] %s269
          %272 = dma.vmem_to_smem %s270, 16, [#allocation8], [#allocation5]
        $region20: #{tpu_custom_call.1} parent=11 // pred_fallthru
          _
        // Predicated region
        $region21: #{tpu_custom_call.1} parent=11 // pred_check
          %p273 = pneg %p218
        $region22: #{tpu_custom_call.1} parent=11 // pred_check_branch
          %275 = sbr.rel (%p273) target = $region24
        $region23: #{tpu_custom_call.1} parent=11 // pred_region
          %s277 = ssub.s32 16, 16
          %278 = vsyncadd [#allocation10], %s277
          %s280 = sshll.u32 %s7, 4
          %s281 = int_to_ptr.vmem [resolvable:$true] %s280
          %283 = dma.vmem_to_smem %s281, 16, [#allocation9], [#allocation10]
        $region24: #{tpu_custom_call.1} parent=11 // pred_fallthru
          _
      $region12: #{tpu_custom_call.1} parent=5 // pred_fallthru
        _
      %p284 = scmp.lt.s32.totalorder %s25, 2
      // Predicated region
      $region25: #{tpu_custom_call.1} parent=5 // pred_check
        %p285 = pneg %p284
      $region26: #{tpu_custom_call.1} parent=5 // pred_check_branch
        %287 = sbr.rel (%p285) target = $region28
      $region27: #{tpu_custom_call.1} parent=5 // pred_region
        // Predicated region
        $region29: #{tpu_custom_call.1} parent=27 // pred_check
          %p288 = pneg %p45
        $region30: #{tpu_custom_call.1} parent=27 // pred_check_branch
          %290 = sbr.rel (%p288) target = $region32
        $region31: #{tpu_custom_call.1} parent=27 // pred_region
          %s291 = smul.u32 2, %s25
          %p292 = scmp.lt.s32.totalorder %s291, 3
          %s293 = scalar_select %p292, %s291, 3
          %s294 = smul.addr %s293, 2
          %s295 = scalar_lea.vmem %s0, %s294
          %s296 = smul.u32 2, %s25
        $region32: #{tpu_custom_call.1} parent=27 // pred_fallthru
          _
        // Predicated region
        $region33: #{tpu_custom_call.1} parent=27 // pred_check
          %p297 = pneg %p71
        $region34: #{tpu_custom_call.1} parent=27 // pred_check_branch
          %299 = sbr.rel (%p297) target = $region36
        $region35: #{tpu_custom_call.1} parent=27 // pred_region
          %s300 = sand.u32 %s61, 1
          %s301 = scalar_lea.sflag [#allocation3], %s300
          %s302 = sand.u32 %s61, 1
          %s303 = smul.addr %s302, 2
          %s304 = scalar_lea.vmem [#allocation2], %s303
          %s305 = smul.u32 2, %s25
          %s307 = ssub.s32 32, 32
          %308 = vsyncadd %s301, %s307
          %s309 = smul.addr %s305, 16
          %s310 = scalar_lea.hbm %s1, %s309
          %s311 = sshll.u32 %s304, 4
          %s312 = int_to_ptr.vmem [resolvable:$true] %s311
          %317 = dma.hbm_to_vmem [thread:$0]  %s310, 32, %s312, %s301, 16, 16, 1
        $region36: #{tpu_custom_call.1} parent=27 // pred_fallthru
          _
        // Predicated region
        $region37: #{tpu_custom_call.1} parent=27 // pred_check
          %p318 = pneg %p97
        $region38: #{tpu_custom_call.1} parent=27 // pred_check_branch
          %320 = sbr.rel (%p318) target = $region40
        $region39: #{tpu_custom_call.1} parent=27 // pred_region
          %s321 = smul.u32 2, %s25
          %p322 = scmp.lt.s32.totalorder %s321, 3
          %s323 = scalar_select %p322, %s321, 3
          %s324 = smul.addr %s323, 2
          %s325 = scalar_lea.vmem %s2, %s324
          %s326 = smul.u32 2, %s25
        $region40: #{tpu_custom_call.1} parent=27 // pred_fallthru
          _
        // Predicated region
        $region41: #{tpu_custom_call.1} parent=27 // pred_check
          %p327 = pneg %p123
        $region42: #{tpu_custom_call.1} parent=27 // pred_check_branch
          %329 = sbr.rel (%p327) target = $region44
        $region43: #{tpu_custom_call.1} parent=27 // pred_region
          %s330 = smul.u32 2, %s25
          %p331 = scmp.lt.s32.totalorder %s330, 3
          %s332 = scalar_select %p331, %s330, 3
          %s333 = scalar_lea.vmem %s3, %s332
          %s334 = smul.u32 2, %s25
        $region44: #{tpu_custom_call.1} parent=27 // pred_fallthru
          _
        // Predicated region
        $region45: #{tpu_custom_call.1} parent=27 // pred_check
          %p335 = pneg %p170
        $region46: #{tpu_custom_call.1} parent=27 // pred_check_branch
          %337 = sbr.rel (%p335) target = $region48
        $region47: #{tpu_custom_call.1} parent=27 // pred_region
          %s338 = sand.u32 %s160, 1
          %s339 = scalar_lea.sflag [#allocation7], %s338
          %s340 = sand.u32 %s160, 1
          %s341 = smul.addr %s340, 16
          %s342 = scalar_lea.vmem [#allocation6], %s341
          %s343 = smul.u32 2, %s25
          %s345 = ssub.s32 256, 256
          %346 = vsyncadd %s339, %s345
          %s347 = smul.addr %s343, 128
          %s348 = scalar_lea.hbm %s5, %s347
          %s349 = sshll.u32 %s342, 4
          %s350 = int_to_ptr.vmem [resolvable:$true] %s349
          %355 = dma.hbm_to_vmem [thread:$0]  %s348, 256, %s350, %s339, 128, 128, 8
        $region48: #{tpu_custom_call.1} parent=27 // pred_fallthru
          _
      $region28: #{tpu_custom_call.1} parent=5 // pred_fallthru
        _
      %p356 = scmp.le.s32.totalorder 1, %s25
      %p357 = scmp.lt.s32.totalorder %s25, 3
      %p358 = pnand %p356, %p357
      %p359 = pneg %p358
      // Predicated region
      $region49: #{tpu_custom_call.1} parent=5 // pred_check
        _
      $region50: #{tpu_custom_call.1} parent=5 // pred_check_branch
        %361 = sbr.rel (%p358) target = $region52
      $region51: #{tpu_custom_call.1} parent=5 // pred_region
        %s362 = ssub.s32 %s25, 1
        %s363 = sand.u32 %s64, 1
        %s364 = scalar_lea.sflag [#allocation3], %s363
        %s365 = sand.u32 %s64, 1
        %s366 = smul.addr %s365, 2
        %s367 = scalar_lea.vmem [#allocation2], %s366
        // Predicated region
        $region53: #{tpu_custom_call.1} parent=51 // pred_check
          %p368 = pneg %p77
        $region54: #{tpu_custom_call.1} parent=51 // pred_check_branch
          %370 = sbr.rel (%p368) target = $region56
        $region55: #{tpu_custom_call.1} parent=51 // pred_region
          %371 = dma.done %s364, 32
        $region56: #{tpu_custom_call.1} parent=51 // pred_fallthru
          _
        %s372 = sand.u32 %s163, 1
        %s373 = scalar_lea.sflag [#allocation7], %s372
        %s374 = sand.u32 %s163, 1
        %s375 = smul.addr %s374, 16
        %s376 = scalar_lea.vmem [#allocation6], %s375
        // Predicated region
        $region57: #{tpu_custom_call.1} parent=51 // pred_check
          %p377 = pneg %p176
        $region58: #{tpu_custom_call.1} parent=51 // pred_check_branch
          %379 = sbr.rel (%p377) target = $region60
        $region59: #{tpu_custom_call.1} parent=51 // pred_region
          %380 = dma.done %s373, 256
        $region60: #{tpu_custom_call.1} parent=51 // pred_fallthru
          _
        // Predicated region
        $region61: #{tpu_custom_call.1} parent=51 // pred_check
          %p381 = pneg %p197
        $region62: #{tpu_custom_call.1} parent=51 // pred_check_branch
          %383 = sbr.rel (%p381) target = $region64
        $region63: #{tpu_custom_call.1} parent=51 // pred_region
          %384 = dma.done [#allocation5], 16
        $region64: #{tpu_custom_call.1} parent=51 // pred_fallthru
          _
        // Predicated region
        $region65: #{tpu_custom_call.1} parent=51 // pred_check
          %p385 = pneg %p218
        $region66: #{tpu_custom_call.1} parent=51 // pred_check_branch
          %387 = sbr.rel (%p385) target = $region68
        $region67: #{tpu_custom_call.1} parent=51 // pred_region
          %388 = dma.done [#allocation10], 16
        $region68: #{tpu_custom_call.1} parent=51 // pred_fallthru
          _
        %389 = sfence
        %s390 = smul.u32 2, %s30
        %p391 = scmp.lt.s32.totalorder %s390, 3
        %s392 = scalar_select %p391, %s390, 3
        %s393 = smul.addr %s392, 2
        %s394 = scalar_lea.vmem %s0, %s393
        %p395 = pneg %p51
        %p396 = pneg %p48
        %s397 = sand.u32 %s64, 1
        %s398 = scalar_lea.sflag [#allocation3], %s397
        %s399 = sand.u32 %s64, 1
        %s400 = smul.addr %s399, 2
        %s401 = scalar_lea.vmem [#allocation2], %s400
        %p402 = pneg %p77
        %p403 = pneg %p74
        %s404 = smul.u32 2, %s30
        %p405 = scmp.lt.s32.totalorder %s404, 3
        %s406 = scalar_select %p405, %s404, 3
        %s407 = smul.addr %s406, 2
        %s408 = scalar_lea.vmem %s2, %s407
        %p409 = pneg %p103
        %p410 = pneg %p100
        %s411 = smul.u32 2, %s30
        %p412 = scmp.lt.s32.totalorder %s411, 3
        %s413 = scalar_select %p412, %s411, 3
        %s414 = scalar_lea.vmem %s3, %s413
        %p415 = pneg %p129
        %p416 = pneg %p126
        %p417 = pneg %p150
        %p418 = pneg %p147
        %s419 = sand.u32 %s163, 1
        %s420 = scalar_lea.sflag [#allocation7], %s419
        %s421 = sand.u32 %s163, 1
        %s422 = smul.addr %s421, 16
        %s423 = scalar_lea.vmem [#allocation6], %s422
        %p424 = pneg %p176
        %p425 = pneg %p173
        %p426 = pneg %p197
        %p427 = pneg %p194
        %p428 = pneg %p218
        %p429 = pneg %p215
        %p430 = pneg %p244
        %p431 = pneg %p241
        %s432 = sand.u32 %s231, 1
        %s433 = scalar_lea.sflag [#allocation4], %s432
        %s434 = sand.u32 %s231, 1
        %s435 = smul.addr %s434, 2
        %s436 = scalar_lea.vmem [#allocation11], %s435
        %s437 = smul.u32 2, %s30
        %p438 = scmp.lt.s32.totalorder %s437, 3
        %s439 = scalar_select %p438, %s437, 3
        %s440 = smul.addr %s439, 2
        %s441 = scalar_lea.vmem %s0, %s440
        %s442 = smul.u32 2, %s30
        %s443 = smul.u32 2, %s30
        %s444 = smul.u32 2, %s30
        %p445 = scmp.lt.s32.totalorder %s444, 3
        %s446 = scalar_select %p445, %s444, 3
        %s447 = smul.addr %s446, 2
        %s448 = scalar_lea.vmem %s2, %s447
        %s449 = smul.u32 2, %s30
        %s450 = smul.u32 2, %s30
        %p451 = scmp.lt.s32.totalorder %s450, 3
        %s452 = scalar_select %p451, %s450, 3
        %s453 = scalar_lea.vmem %s3, %s452
        %s454 = smul.u32 2, %s30
        %s455 = smul.u32 2, %s30
        %v457 = vld [vmem:[%s4] sm:$0xf]
        %v458 = vld [vmem:[%s4 + $0x4] sm:$0xf]
        %s459 = smul.u32 %s30, 2
        %v460 = vld [vmem:[%s441] sm:$0x3]
        %v461 = vld [vmem:[%s367] sm:$0x1]
        %v463 = vlaneseq
        %v464 = vshrl.u32 %v463, 7
        %v465 = vsub.s32 0, %v464
        %v466 = vrot.slane %v461, %v465
        %v470 = vunpack.c.l.b16 %v457
        %v471 = vunpack.c.l.b16 %v458
        %v472 = vpack.c.b16 %v471, %v470
        %vm473 = vcmask 31744
        %v475 = vsel %vm473, %v472, 0
        %vm477 = vcmask 1041408
        %v479 = vsel %vm477, %v460, 0
        %481 = vmatprep.subr.bf16.mxu0 0
        %482 = vmatpush1.bf16.msra.mxu0 %v479
        %483 = vmatprep.subr.bf16.mxu0 0
        %484 = vmatpush1.bf16.msra.mxu0 0
        %485 = vmatprep.subr.bf16.mxu0 0
        %486 = vmatpush1.bf16.msra.mxu0 0
        %487 = vmatprep.subr.bf16.mxu0 0
        %488 = vmatpush1.bf16.msra.mxu0 0
        %489 = vmatprep.subr.bf16.mxu0 0
        %490 = vmatpush1.bf16.msra.mxu0 0
        %491 = vmatprep.subr.bf16.mxu0 0
        %492 = vmatpush1.bf16.msra.mxu0 0
        %493 = vmatprep.subr.bf16.mxu0 0
        %494 = vmatpush1.bf16.msra.mxu0 0
        %495 = vmatprep.subr.bf16.mxu0 0
        %496 = vmatpush1.bf16.msra.mxu0 0
        %497 = vmatprep.subr.bf16.mxu0 0
        %498 = vmatpush1.bf16.msra.mxu0 0
        %499 = vmatprep.subr.bf16.mxu0 0
        %500 = vmatpush1.bf16.msra.mxu0 0
        %501 = vmatprep.subr.bf16.mxu0 0
        %502 = vmatpush1.bf16.msra.mxu0 0
        %503 = vmatprep.subr.bf16.mxu0 0
        %504 = vmatpush1.bf16.msra.mxu0 0
        %505 = vmatprep.subr.bf16.mxu0 0
        %506 = vmatpush1.bf16.msra.mxu0 0
        %507 = vmatprep.subr.bf16.mxu0 0
        %508 = vmatpush1.bf16.msra.mxu0 0
        %509 = vmatprep.subr.bf16.mxu0 0
        %510 = vmatpush1.bf16.msra.mxu0 0
        %511 = vmatprep.subr.bf16.mxu0 0
        %512 = vmatpush1.bf16.msra.mxu0 0
        %513 = vmatprep.mubr.bf16.mxu0 0
        %514 = vmatmul.mubr.bf16.gmra.mrb[0].mxu0 %v475
        %v515 = vpop.f32.mrb[0].mxu0
        %v516 = vadd.f32 %v466, %v515
        %v517 = vpop.f32.mrb[0].mxu0
        %v518 = vpop.f32.mrb[0].mxu0
        %v519 = vadd.f32 %v466, %v518
        %v520 = vpop.f32.mrb[0].mxu0
        %521 = vdwg.mxu0
        %v522 = vld [vmem:[%s448] sm:$0x3]
        %v523 = vld [vmem:[%s453] sm:$0x1]
        %v525 = vlaneseq
        %v526 = vshrl.u32 %v525, 7
        %v527 = vsub.s32 0, %v526
        %v528 = vrot.slane %v523, %v527
        %v531 = vsel %vm477, %v522, 0
        %533 = vmatprep.subr.bf16.mxu0 0
        %534 = vmatpush1.bf16.msra.mxu0 %v531
        %535 = vmatprep.subr.bf16.mxu0 0
        %536 = vmatpush1.bf16.msra.mxu0 0
        %537 = vmatprep.subr.bf16.mxu0 0
        %538 = vmatpush1.bf16.msra.mxu0 0
        %539 = vmatprep.subr.bf16.mxu0 0
        %540 = vmatpush1.bf16.msra.mxu0 0
        %541 = vmatprep.subr.bf16.mxu0 0
        %542 = vmatpush1.bf16.msra.mxu0 0
        %543 = vmatprep.subr.bf16.mxu0 0
        %544 = vmatpush1.bf16.msra.mxu0 0
        %545 = vmatprep.subr.bf16.mxu0 0
        %546 = vmatpush1.bf16.msra.mxu0 0
        %547 = vmatprep.subr.bf16.mxu0 0
        %548 = vmatpush1.bf16.msra.mxu0 0
        %549 = vmatprep.subr.bf16.mxu0 0
        %550 = vmatpush1.bf16.msra.mxu0 0
        %551 = vmatprep.subr.bf16.mxu0 0
        %552 = vmatpush1.bf16.msra.mxu0 0
        %553 = vmatprep.subr.bf16.mxu0 0
        %554 = vmatpush1.bf16.msra.mxu0 0
        %555 = vmatprep.subr.bf16.mxu0 0
        %556 = vmatpush1.bf16.msra.mxu0 0
        %557 = vmatprep.subr.bf16.mxu0 0
        %558 = vmatpush1.bf16.msra.mxu0 0
        %559 = vmatprep.subr.bf16.mxu0 0
        %560 = vmatpush1.bf16.msra.mxu0 0
        %561 = vmatprep.subr.bf16.mxu0 0
        %562 = vmatpush1.bf16.msra.mxu0 0
        %563 = vmatprep.subr.bf16.mxu0 0
        %564 = vmatpush1.bf16.msra.mxu0 0
        %565 = vmatprep.mubr.bf16.mxu0 0
        %566 = vmatmul.mubr.bf16.gmra.mrb[0].mxu0 %v475
        %v567 = vpop.f32.mrb[0].mxu0
        %v568 = vadd.f32 %v528, %v567
        %v569 = vpop.f32.mrb[0].mxu0
        %v570 = vpop.f32.mrb[0].mxu0
        %v571 = vadd.f32 %v528, %v570
        %v572 = vpop.f32.mrb[0].mxu0
        %573 = vdwg.mxu0
        %v574 = vpack.c.bf16 %v516, %v516
        %v575 = vpack.c.bf16 %v519, %v519
        %v576 = vpack.c.bf16 %v568, %v568
        %v577 = vpack.c.bf16 %v571, %v571
        %v578 = vld [vmem:[%s376] sm:$0xff]
        %vm579 = vcmask 130048
        %v581 = vsel %vm579, %v576, 0
        %v584 = vsel %vm579, %v574, 0
        %586 = vmatprep.subr.bf16.mxu0 0
        %587 = vmatpush1.bf16.xpose.msra.mxu0 %v584
        %588 = vmatprep.subr.bf16.mxu0 0
        %589 = vmatpush1.bf16.xpose.msra.mxu0 0
        %590 = vmatprep.subr.bf16.mxu0 0
        %591 = vmatpush1.bf16.xpose.msra.mxu0 0
        %592 = vmatprep.subr.bf16.mxu0 0
        %593 = vmatpush1.bf16.xpose.msra.mxu0 0
        %594 = vmatprep.subr.bf16.mxu0 0
        %595 = vmatpush1.bf16.xpose.msra.mxu0 0
        %596 = vmatprep.subr.bf16.mxu0 0
        %597 = vmatpush1.bf16.xpose.msra.mxu0 0
        %598 = vmatprep.subr.bf16.mxu0 0
        %599 = vmatpush1.bf16.xpose.msra.mxu0 0
        %600 = vmatprep.subr.bf16.mxu0 0
        %601 = vmatpush1.bf16.xpose.msra.mxu0 0
        %602 = vmatprep.subr.bf16.mxu0 0
        %603 = vmatpush1.bf16.xpose.msra.mxu0 0
        %604 = vmatprep.subr.bf16.mxu0 0
        %605 = vmatpush1.bf16.xpose.msra.mxu0 0
        %606 = vmatprep.subr.bf16.mxu0 0
        %607 = vmatpush1.bf16.xpose.msra.mxu0 0
        %608 = vmatprep.subr.bf16.mxu0 0
        %609 = vmatpush1.bf16.xpose.msra.mxu0 0
        %610 = vmatprep.subr.bf16.mxu0 0
        %611 = vmatpush1.bf16.xpose.msra.mxu0 0
        %612 = vmatprep.subr.bf16.mxu0 0
        %613 = vmatpush1.bf16.xpose.msra.mxu0 0
        %614 = vmatprep.subr.bf16.mxu0 0
        %615 = vmatpush1.bf16.xpose.msra.mxu0 0
        %616 = vmatprep.subr.bf16.mxu0 0
        %617 = vmatpush1.bf16.xpose.msra.mxu0 0
        %618 = vmatprep.mubr.bf16.mxu0 0
        %619 = vmatmul.mubr.bf16.gmra.mrb[0].mxu0 %v581
        %v620 = vpop.f32.mrb[0].mxu0
        %v621 = vadd.f32 %v578, %v620
        %v622 = vpop.f32.mrb[0].mxu0
        %v623 = vpop.f32.mrb[0].mxu0
        %v624 = vpop.f32.mrb[0].mxu0
        %625 = vdwg.mxu0
        %v627 = vsel %vm579, %v577, 0
        %v630 = vsel %vm579, %v575, 0
        %632 = vmatprep.subr.bf16.mxu0 0
        %633 = vmatpush1.bf16.xpose.msra.mxu0 %v630
        %634 = vmatprep.subr.bf16.mxu0 0
        %635 = vmatpush1.bf16.xpose.msra.mxu0 0
        %636 = vmatprep.subr.bf16.mxu0 0
        %637 = vmatpush1.bf16.xpose.msra.mxu0 0
        %638 = vmatprep.subr.bf16.mxu0 0
        %639 = vmatpush1.bf16.xpose.msra.mxu0 0
        %640 = vmatprep.subr.bf16.mxu0 0
        %641 = vmatpush1.bf16.xpose.msra.mxu0 0
        %642 = vmatprep.subr.bf16.mxu0 0
        %643 = vmatpush1.bf16.xpose.msra.mxu0 0
        %644 = vmatprep.subr.bf16.mxu0 0
        %645 = vmatpush1.bf16.xpose.msra.mxu0 0
        %646 = vmatprep.subr.bf16.mxu0 0
        %647 = vmatpush1.bf16.xpose.msra.mxu0 0
        %648 = vmatprep.subr.bf16.mxu0 0
        %649 = vmatpush1.bf16.xpose.msra.mxu0 0
        %650 = vmatprep.subr.bf16.mxu0 0
        %651 = vmatpush1.bf16.xpose.msra.mxu0 0
        %652 = vmatprep.subr.bf16.mxu0 0
        %653 = vmatpush1.bf16.xpose.msra.mxu0 0
        %654 = vmatprep.subr.bf16.mxu0 0
        %655 = vmatpush1.bf16.xpose.msra.mxu0 0
        %656 = vmatprep.subr.bf16.mxu0 0
        %657 = vmatpush1.bf16.xpose.msra.mxu0 0
        %658 = vmatprep.subr.bf16.mxu0 0
        %659 = vmatpush1.bf16.xpose.msra.mxu0 0
        %660 = vmatprep.subr.bf16.mxu0 0
        %661 = vmatpush1.bf16.xpose.msra.mxu0 0
        %662 = vmatprep.subr.bf16.mxu0 0
        %663 = vmatpush1.bf16.xpose.msra.mxu0 0
        %664 = vmatprep.mubr.bf16.mxu0 0
        %665 = vmatmul.mubr.bf16.gmra.mrb[0].mxu0 %v627
        %v666 = vpop.f32.mrb[0].mxu0
        %v667 = vadd.f32 %v578, %v666
        %v668 = vpop.f32.mrb[0].mxu0
        %v669 = vpop.f32.mrb[0].mxu0
        %v670 = vpop.f32.mrb[0].mxu0
        %671 = vdwg.mxu0
        %vm672 = vcmask 64512
        %v673 = vsel %vm672, %v621, 0.0
        %v674 = vsel %vm672, %v667, 0.0
        %v675 = vadd.f32 %v673, %v674
        %676 = vadd.xlane.f32.xlu0 %v675
        %v677 = vpop.xlane.xlu0 %676
        %v678 = vrot.slane %v677, 4
        %v679 = vadd.f32 %v677, %v678
        %v680 = vrot.slane %v679, 2
        %v681 = vadd.f32 %v679, %v680
        %v682 = vrot.slane %v681, 1
        %v683 = vadd.f32 %v681, %v682
        %s684 = vtos %v683
        %s685 = smul.f32 %s684, 0.0078125
        %v686 = vstv %s685
        %v687 = vsub.f32 %v621, %v686
        %v688 = vsub.f32 %v667, %v686
        %v689 = vmul.f32 %v687, %v687
        %v690 = vmul.f32 %v688, %v688
        %v691 = vsel %vm672, %v689, 0.0
        %v692 = vsel %vm672, %v690, 0.0
        %v693 = vadd.f32 %v691, %v692
        %694 = vadd.xlane.f32.xlu0 %v693
        %v695 = vpop.xlane.xlu0 %694
        %v696 = vrot.slane %v695, 4
        %v697 = vadd.f32 %v695, %v696
        %v698 = vrot.slane %v697, 2
        %v699 = vadd.f32 %v697, %v698
        %v700 = vrot.slane %v699, 1
        %v701 = vadd.f32 %v699, %v700
        %s702 = vtos %v701
        %s703 = smul.f32 %s702, 0.0078125
        %s704 = sadd.f32 %s703, 1e-05
        %v705 = vstv %s704
        %v706 = vrsqrt.pop %v705
        %s707 = vtos %v706
        %s708 = sld [smem:[#allocation8 + %s459]]
        %s709 = smul.f32 %s707, %s708
        %v710 = vstv %s709
        %v711 = vmul.f32 %v687, %v710
        %v712 = vmul.f32 %v688, %v710
        %s713 = sld [smem:[#allocation9 + %s459]]
        %v714 = vstv %s713
        %v715 = vadd.f32 %v711, %v714
        %v716 = vadd.f32 %v712, %v714
        %v717 = vmax.f32 %v715, 0.0
        %v718 = vmax.f32 %v716, 0.0
        %v719 = vcombine.high %v717, 0.0
        %v721 = vunpack.c.l.s4 1983009808
        %v722 = vunpack.c.0.s8 %v721
        %v723 = vlaneseq
        %v724 = vshrl.u32 %v723, 7
        %v725 = vsub.s32 %v722, %v724
        %v726 = vrot.slane %v717, %v725
        %v728 = vunpack.c.l.s4 1983009808
        %v729 = vunpack.c.0.s8 %v728
        %v730 = vlaneseq
        %v731 = vshrl.u32 %v730, 7
        %v732 = vsub.s32 %v729, %v731
        %v733 = vrot.slane %v719, %v732
        %v734 = vcombine.high %v718, 0.0
        %v736 = vunpack.c.l.s4 1983009808
        %v737 = vunpack.c.0.s8 %v736
        %v738 = vlaneseq
        %v739 = vshrl.u32 %v738, 7
        %v740 = vsub.s32 %v737, %v739
        %v741 = vrot.slane %v718, %v740
        %v743 = vunpack.c.l.s4 1983009808
        %v744 = vunpack.c.0.s8 %v743
        %v745 = vlaneseq
        %v746 = vshrl.u32 %v745, 7
        %v747 = vsub.s32 %v744, %v746
        %v748 = vrot.slane %v734, %v747
        %v749 = vcombine.low %v726, %v741
        %v750 = vcombine.high %v726, %v741
        %v752 = vunpack.c.l.s4 1934713408
        %v753 = vunpack.c.0.s8 %v752
        %v754 = vlaneseq
        %v755 = vshrl.u32 %v754, 7
        %v756 = vsub.s32 %v753, %v755
        %v757 = vrot.slane %v749, %v756
        %v759 = vunpack.c.l.s4 1934713408
        %v760 = vunpack.c.0.s8 %v759
        %v761 = vlaneseq
        %v762 = vshrl.u32 %v761, 7
        %v763 = vsub.s32 %v760, %v762
        %v764 = vrot.slane %v750, %v763
        %v765 = vcombine.low %v733, %v748
        %v766 = vcombine.high %v733, %v748
        %v768 = vunpack.c.l.s4 1934713408
        %v769 = vunpack.c.0.s8 %v768
        %v770 = vlaneseq
        %v771 = vshrl.u32 %v770, 7
        %v772 = vsub.s32 %v769, %v771
        %v773 = vrot.slane %v765, %v772
        %v775 = vunpack.c.l.s4 1934713408
        %v776 = vunpack.c.0.s8 %v775
        %v777 = vlaneseq
        %v778 = vshrl.u32 %v777, 7
        %v779 = vsub.s32 %v776, %v778
        %v780 = vrot.slane %v766, %v779
        %v781 = vcombine.high %v757, 0.0
        %v782 = vcombine.high %v764, 0.0
        %v783 = vcombine.high %v773, 0.0
        %v784 = vcombine.high %v780, 0.0
        %786 = vrot.lane.b32.xlu0 %v781, 8
        %v787 = vpop.permute.xlu0 %786
        %790 = vrot.lane.b32.xlu0 %v764, 16
        %v791 = vpop.permute.xlu0 %790
        %794 = vrot.lane.b32.xlu0 %v782, 24
        %v795 = vpop.permute.xlu0 %794
        %798 = vrot.lane.b32.xlu0 %v773, 32
        %v799 = vpop.permute.xlu0 %798
        %802 = vrot.lane.b32.xlu0 %v783, 40
        %v803 = vpop.permute.xlu0 %802
        %806 = vrot.lane.b32.xlu0 %v780, 48
        %v807 = vpop.permute.xlu0 %806
        %810 = vrot.lane.b32.xlu0 %v784, 56
        %v811 = vpop.permute.xlu0 %810
        %v813 = vsel %vm672, %v757, %v787
        %v814 = vsel %vm579, %v813, %v791
        %vm815 = vcmask 195584
        %v816 = vsel %vm815, %v814, %v795
        %vm817 = vcmask 261120
        %v818 = vsel %vm817, %v816, %v799
        %vm819 = vcmask 326656
        %v820 = vsel %vm819, %v818, %v803
        %vm821 = vcmask 392192
        %v822 = vsel %vm821, %v820, %v807
        %vm823 = vcmask 457728
        %v824 = vsel %vm823, %v822, %v811
        %s825 = sadd.s32 %s459, 1
        %s826 = scalar_lea.vmem %s441, 2
        %v827 = vld [vmem:[%s826] sm:$0x3]
        %s828 = scalar_lea.vmem %s367, 1 [#allocation2]
        %v829 = vld [vmem:[%s828] sm:$0x1]
        %v831 = vlaneseq
        %v832 = vshrl.u32 %v831, 7
        %v833 = vsub.s32 0, %v832
        %v834 = vrot.slane %v829, %v833
        %v837 = vsel %vm477, %v827, 0
        %839 = vmatprep.subr.bf16.mxu0 0
        %840 = vmatpush1.bf16.msra.mxu0 %v837
        %841 = vmatprep.subr.bf16.mxu0 0
        %842 = vmatpush1.bf16.msra.mxu0 0
        %843 = vmatprep.subr.bf16.mxu0 0
        %844 = vmatpush1.bf16.msra.mxu0 0
        %845 = vmatprep.subr.bf16.mxu0 0
        %846 = vmatpush1.bf16.msra.mxu0 0
        %847 = vmatprep.subr.bf16.mxu0 0
        %848 = vmatpush1.bf16.msra.mxu0 0
        %849 = vmatprep.subr.bf16.mxu0 0
        %850 = vmatpush1.bf16.msra.mxu0 0
        %851 = vmatprep.subr.bf16.mxu0 0
        %852 = vmatpush1.bf16.msra.mxu0 0
        %853 = vmatprep.subr.bf16.mxu0 0
        %854 = vmatpush1.bf16.msra.mxu0 0
        %855 = vmatprep.subr.bf16.mxu0 0
        %856 = vmatpush1.bf16.msra.mxu0 0
        %857 = vmatprep.subr.bf16.mxu0 0
        %858 = vmatpush1.bf16.msra.mxu0 0
        %859 = vmatprep.subr.bf16.mxu0 0
        %860 = vmatpush1.bf16.msra.mxu0 0
        %861 = vmatprep.subr.bf16.mxu0 0
        %862 = vmatpush1.bf16.msra.mxu0 0
        %863 = vmatprep.subr.bf16.mxu0 0
        %864 = vmatpush1.bf16.msra.mxu0 0
        %865 = vmatprep.subr.bf16.mxu0 0
        %866 = vmatpush1.bf16.msra.mxu0 0
        %867 = vmatprep.subr.bf16.mxu0 0
        %868 = vmatpush1.bf16.msra.mxu0 0
        %869 = vmatprep.subr.bf16.mxu0 0
        %870 = vmatpush1.bf16.msra.mxu0 0
        %871 = vmatprep.mubr.bf16.mxu0 0
        %872 = vmatmul.mubr.bf16.gmra.mrb[0].mxu0 %v475
        %v873 = vpop.f32.mrb[0].mxu0
        %v874 = vadd.f32 %v834, %v873
        %v875 = vpop.f32.mrb[0].mxu0
        %v876 = vpop.f32.mrb[0].mxu0
        %v877 = vadd.f32 %v834, %v876
        %v878 = vpop.f32.mrb[0].mxu0
        %879 = vdwg.mxu0
        %s880 = scalar_lea.vmem %s448, 2
        %v881 = vld [vmem:[%s880] sm:$0x3]
        %s882 = scalar_lea.vmem %s453, 1
        %v883 = vld [vmem:[%s882] sm:$0x1]
        %v885 = vlaneseq
        %v886 = vshrl.u32 %v885, 7
        %v887 = vsub.s32 0, %v886
        %v888 = vrot.slane %v883, %v887
        %v891 = vsel %vm477, %v881, 0
        %893 = vmatprep.subr.bf16.mxu0 0
        %894 = vmatpush1.bf16.msra.mxu0 %v891
        %895 = vmatprep.subr.bf16.mxu0 0
        %896 = vmatpush1.bf16.msra.mxu0 0
        %897 = vmatprep.subr.bf16.mxu0 0
        %898 = vmatpush1.bf16.msra.mxu0 0
        %899 = vmatprep.subr.bf16.mxu0 0
        %900 = vmatpush1.bf16.msra.mxu0 0
        %901 = vmatprep.subr.bf16.mxu0 0
        %902 = vmatpush1.bf16.msra.mxu0 0
        %903 = vmatprep.subr.bf16.mxu0 0
        %904 = vmatpush1.bf16.msra.mxu0 0
        %905 = vmatprep.subr.bf16.mxu0 0
        %906 = vmatpush1.bf16.msra.mxu0 0
        %907 = vmatprep.subr.bf16.mxu0 0
        %908 = vmatpush1.bf16.msra.mxu0 0
        %909 = vmatprep.subr.bf16.mxu0 0
        %910 = vmatpush1.bf16.msra.mxu0 0
        %911 = vmatprep.subr.bf16.mxu0 0
        %912 = vmatpush1.bf16.msra.mxu0 0
        %913 = vmatprep.subr.bf16.mxu0 0
        %914 = vmatpush1.bf16.msra.mxu0 0
        %915 = vmatprep.subr.bf16.mxu0 0
        %916 = vmatpush1.bf16.msra.mxu0 0
        %917 = vmatprep.subr.bf16.mxu0 0
        %918 = vmatpush1.bf16.msra.mxu0 0
        %919 = vmatprep.subr.bf16.mxu0 0
        %920 = vmatpush1.bf16.msra.mxu0 0
        %921 = vmatprep.subr.bf16.mxu0 0
        %922 = vmatpush1.bf16.msra.mxu0 0
        %923 = vmatprep.subr.bf16.mxu0 0
        %924 = vmatpush1.bf16.msra.mxu0 0
        %925 = vmatprep.mubr.bf16.mxu0 0
        %926 = vmatmul.mubr.bf16.gmra.mrb[0].mxu0 %v475
        %v927 = vpop.f32.mrb[0].mxu0
        %v928 = vadd.f32 %v888, %v927
        %v929 = vpop.f32.mrb[0].mxu0
        %v930 = vpop.f32.mrb[0].mxu0
        %v931 = vadd.f32 %v888, %v930
        %v932 = vpop.f32.mrb[0].mxu0
        %933 = vdwg.mxu0
        %v934 = vpack.c.bf16 %v874, %v874
        %v935 = vpack.c.bf16 %v877, %v877
        %v936 = vpack.c.bf16 %v928, %v928
        %v937 = vpack.c.bf16 %v931, %v931
        %s938 = scalar_lea.vmem %s376, 8 [#allocation6]
        %v939 = vld [vmem:[%s938] sm:$0xff]
        %v941 = vsel %vm579, %v936, 0
        %v944 = vsel %vm579, %v934, 0
        %946 = vmatprep.subr.bf16.mxu0 0
        %947 = vmatpush1.bf16.xpose.msra.mxu0 %v944
        %948 = vmatprep.subr.bf16.mxu0 0
        %949 = vmatpush1.bf16.xpose.msra.mxu0 0
        %950 = vmatprep.subr.bf16.mxu0 0
        %951 = vmatpush1.bf16.xpose.msra.mxu0 0
        %952 = vmatprep.subr.bf16.mxu0 0
        %953 = vmatpush1.bf16.xpose.msra.mxu0 0
        %954 = vmatprep.subr.bf16.mxu0 0
        %955 = vmatpush1.bf16.xpose.msra.mxu0 0
        %956 = vmatprep.subr.bf16.mxu0 0
        %957 = vmatpush1.bf16.xpose.msra.mxu0 0
        %958 = vmatprep.subr.bf16.mxu0 0
        %959 = vmatpush1.bf16.xpose.msra.mxu0 0
        %960 = vmatprep.subr.bf16.mxu0 0
        %961 = vmatpush1.bf16.xpose.msra.mxu0 0
        %962 = vmatprep.subr.bf16.mxu0 0
        %963 = vmatpush1.bf16.xpose.msra.mxu0 0
        %964 = vmatprep.subr.bf16.mxu0 0
        %965 = vmatpush1.bf16.xpose.msra.mxu0 0
        %966 = vmatprep.subr.bf16.mxu0 0
        %967 = vmatpush1.bf16.xpose.msra.mxu0 0
        %968 = vmatprep.subr.bf16.mxu0 0
        %969 = vmatpush1.bf16.xpose.msra.mxu0 0
        %970 = vmatprep.subr.bf16.mxu0 0
        %971 = vmatpush1.bf16.xpose.msra.mxu0 0
        %972 = vmatprep.subr.bf16.mxu0 0
        %973 = vmatpush1.bf16.xpose.msra.mxu0 0
        %974 = vmatprep.subr.bf16.mxu0 0
        %975 = vmatpush1.bf16.xpose.msra.mxu0 0
        %976 = vmatprep.subr.bf16.mxu0 0
        %977 = vmatpush1.bf16.xpose.msra.mxu0 0
        %978 = vmatprep.mubr.bf16.mxu0 0
        %979 = vmatmul.mubr.bf16.gmra.mrb[0].mxu0 %v941
        %v980 = vpop.f32.mrb[0].mxu0
        %v981 = vadd.f32 %v939, %v980
        %v982 = vpop.f32.mrb[0].mxu0
        %v983 = vpop.f32.mrb[0].mxu0
        %v984 = vpop.f32.mrb[0].mxu0
        %985 = vdwg.mxu0
        %v987 = vsel %vm579, %v937, 0
        %v990 = vsel %vm579, %v935, 0
        %992 = vmatprep.subr.bf16.mxu0 0
        %993 = vmatpush1.bf16.xpose.msra.mxu0 %v990
        %994 = vmatprep.subr.bf16.mxu0 0
        %995 = vmatpush1.bf16.xpose.msra.mxu0 0
        %996 = vmatprep.subr.bf16.mxu0 0
        %997 = vmatpush1.bf16.xpose.msra.mxu0 0
        %998 = vmatprep.subr.bf16.mxu0 0
        %999 = vmatpush1.bf16.xpose.msra.mxu0 0
        %1000 = vmatprep.subr.bf16.mxu0 0
        %1001 = vmatpush1.bf16.xpose.msra.mxu0 0
        %1002 = vmatprep.subr.bf16.mxu0 0
        %1003 = vmatpush1.bf16.xpose.msra.mxu0 0
        %1004 = vmatprep.subr.bf16.mxu0 0
        %1005 = vmatpush1.bf16.xpose.msra.mxu0 0
        %1006 = vmatprep.subr.bf16.mxu0 0
        %1007 = vmatpush1.bf16.xpose.msra.mxu0 0
        %1008 = vmatprep.subr.bf16.mxu0 0
        %1009 = vmatpush1.bf16.xpose.msra.mxu0 0
        %1010 = vmatprep.subr.bf16.mxu0 0
        %1011 = vmatpush1.bf16.xpose.msra.mxu0 0
        %1012 = vmatprep.subr.bf16.mxu0 0
        %1013 = vmatpush1.bf16.xpose.msra.mxu0 0
        %1014 = vmatprep.subr.bf16.mxu0 0
        %1015 = vmatpush1.bf16.xpose.msra.mxu0 0
        %1016 = vmatprep.subr.bf16.mxu0 0
        %1017 = vmatpush1.bf16.xpose.msra.mxu0 0
        %1018 = vmatprep.subr.bf16.mxu0 0
        %1019 = vmatpush1.bf16.xpose.msra.mxu0 0
        %1020 = vmatprep.subr.bf16.mxu0 0
        %1021 = vmatpush1.bf16.xpose.msra.mxu0 0
        %1022 = vmatprep.subr.bf16.mxu0 0
        %1023 = vmatpush1.bf16.xpose.msra.mxu0 0
        %1024 = vmatprep.mubr.bf16.mxu0 0
        %1025 = vmatmul.mubr.bf16.gmra.mrb[0].mxu0 %v987
        %v1026 = vpop.f32.mrb[0].mxu0
        %v1027 = vadd.f32 %v939, %v1026
        %v1028 = vpop.f32.mrb[0].mxu0
        %v1029 = vpop.f32.mrb[0].mxu0
        %v1030 = vpop.f32.mrb[0].mxu0
        %1031 = vdwg.mxu0
        %v1032 = vsel %vm672, %v981, 0.0
        %v1033 = vsel %vm672, %v1027, 0.0
        %v1034 = vadd.f32 %v1032, %v1033
        %1035 = vadd.xlane.f32.xlu0 %v1034
        %v1036 = vpop.xlane.xlu0 %1035
        %v1037 = vrot.slane %v1036, 4
        %v1038 = vadd.f32 %v1036, %v1037
        %v1039 = vrot.slane %v1038, 2
        %v1040 = vadd.f32 %v1038, %v1039
        %v1041 = vrot.slane %v1040, 1
        %v1042 = vadd.f32 %v1040, %v1041
        %s1043 = vtos %v1042
        %s1044 = smul.f32 %s1043, 0.0078125
        %v1045 = vstv %s1044
        %v1046 = vsub.f32 %v981, %v1045
        %v1047 = vsub.f32 %v1027, %v1045
        %v1048 = vmul.f32 %v1046, %v1046
        %v1049 = vmul.f32 %v1047, %v1047
        %v1050 = vsel %vm672, %v1048, 0.0
        %v1051 = vsel %vm672, %v1049, 0.0
        %v1052 = vadd.f32 %v1050, %v1051
        %1053 = vadd.xlane.f32.xlu0 %v1052
        %v1054 = vpop.xlane.xlu0 %1053
        %v1055 = vrot.slane %v1054, 4
        %v1056 = vadd.f32 %v1054, %v1055
        %v1057 = vrot.slane %v1056, 2
        %v1058 = vadd.f32 %v1056, %v1057
        %v1059 = vrot.slane %v1058, 1
        %v1060 = vadd.f32 %v1058, %v1059
        %s1061 = vtos %v1060
        %s1062 = smul.f32 %s1061, 0.0078125
        %s1063 = sadd.f32 %s1062, 1e-05
        %v1064 = vstv %s1063
        %v1065 = vrsqrt.pop %v1064
        %s1066 = vtos %v1065
        %s1067 = sld [smem:[#allocation8 + %s825]]
        %s1068 = smul.f32 %s1066, %s1067
        %v1069 = vstv %s1068
        %v1070 = vmul.f32 %v1046, %v1069
        %v1071 = vmul.f32 %v1047, %v1069
        %s1072 = sld [smem:[#allocation9 + %s825]]
        %v1073 = vstv %s1072
        %v1074 = vadd.f32 %v1070, %v1073
        %v1075 = vadd.f32 %v1071, %v1073
        %v1076 = vmax.f32 %v1074, 0.0
        %v1077 = vmax.f32 %v1075, 0.0
        %v1078 = vcombine.high %v1076, 0.0
        %v1080 = vunpack.c.l.s4 1983009808
        %v1081 = vunpack.c.0.s8 %v1080
        %v1082 = vlaneseq
        %v1083 = vshrl.u32 %v1082, 7
        %v1084 = vsub.s32 %v1081, %v1083
        %v1085 = vrot.slane %v1076, %v1084
        %v1087 = vunpack.c.l.s4 1983009808
        %v1088 = vunpack.c.0.s8 %v1087
        %v1089 = vlaneseq
        %v1090 = vshrl.u32 %v1089, 7
        %v1091 = vsub.s32 %v1088, %v1090
        %v1092 = vrot.slane %v1078, %v1091
        %v1093 = vcombine.high %v1077, 0.0
        %v1095 = vunpack.c.l.s4 1983009808
        %v1096 = vunpack.c.0.s8 %v1095
        %v1097 = vlaneseq
        %v1098 = vshrl.u32 %v1097, 7
        %v1099 = vsub.s32 %v1096, %v1098
        %v1100 = vrot.slane %v1077, %v1099
        %v1102 = vunpack.c.l.s4 1983009808
        %v1103 = vunpack.c.0.s8 %v1102
        %v1104 = vlaneseq
        %v1105 = vshrl.u32 %v1104, 7
        %v1106 = vsub.s32 %v1103, %v1105
        %v1107 = vrot.slane %v1093, %v1106
        %v1108 = vcombine.low %v1085, %v1100
        %v1109 = vcombine.high %v1085, %v1100
        %v1111 = vunpack.c.l.s4 1934713408
        %v1112 = vunpack.c.0.s8 %v1111
        %v1113 = vlaneseq
        %v1114 = vshrl.u32 %v1113, 7
        %v1115 = vsub.s32 %v1112, %v1114
        %v1116 = vrot.slane %v1108, %v1115
        %v1118 = vunpack.c.l.s4 1934713408
        %v1119 = vunpack.c.0.s8 %v1118
        %v1120 = vlaneseq
        %v1121 = vshrl.u32 %v1120, 7
        %v1122 = vsub.s32 %v1119, %v1121
        %v1123 = vrot.slane %v1109, %v1122
        %v1124 = vcombine.low %v1092, %v1107
        %v1125 = vcombine.high %v1092, %v1107
        %v1127 = vunpack.c.l.s4 1934713408
        %v1128 = vunpack.c.0.s8 %v1127
        %v1129 = vlaneseq
        %v1130 = vshrl.u32 %v1129, 7
        %v1131 = vsub.s32 %v1128, %v1130
        %v1132 = vrot.slane %v1124, %v1131
        %v1134 = vunpack.c.l.s4 1934713408
        %v1135 = vunpack.c.0.s8 %v1134
        %v1136 = vlaneseq
        %v1137 = vshrl.u32 %v1136, 7
        %v1138 = vsub.s32 %v1135, %v1137
        %v1139 = vrot.slane %v1125, %v1138
        %v1140 = vcombine.high %v1116, 0.0
        %v1141 = vcombine.high %v1123, 0.0
        %v1142 = vcombine.high %v1132, 0.0
        %v1143 = vcombine.high %v1139, 0.0
        %1145 = vrot.lane.b32.xlu0 %v1140, 8
        %v1146 = vpop.permute.xlu0 %1145
        %1149 = vrot.lane.b32.xlu0 %v1123, 16
        %v1150 = vpop.permute.xlu0 %1149
        %1153 = vrot.lane.b32.xlu0 %v1141, 24
        %v1154 = vpop.permute.xlu0 %1153
        %1157 = vrot.lane.b32.xlu0 %v1132, 32
        %v1158 = vpop.permute.xlu0 %1157
        %1161 = vrot.lane.b32.xlu0 %v1142, 40
        %v1162 = vpop.permute.xlu0 %1161
        %1165 = vrot.lane.b32.xlu0 %v1139, 48
        %v1166 = vpop.permute.xlu0 %1165
        %1169 = vrot.lane.b32.xlu0 %v1143, 56
        %v1170 = vpop.permute.xlu0 %1169
        %v1172 = vsel %vm672, %v1116, %v1146
        %v1173 = vsel %vm579, %v1172, %v1150
        %v1174 = vsel %vm815, %v1173, %v1154
        %v1175 = vsel %vm817, %v1174, %v1158
        %v1176 = vsel %vm819, %v1175, %v1162
        %v1177 = vsel %vm821, %v1176, %v1166
        %v1178 = vsel %vm823, %v1177, %v1170
        %1180 = vrot.lane.b32.xlu0 %v1178, 64
        %v1181 = vpop.permute.xlu0 %1180
        %vm1183 = vcmask 523264
        %v1184 = vsel %vm1183, %v824, %v1181
        %1185 = vst [vmem:[%s436] sm:$0x3] %v1184
        %s1186 = sand.u32 %s231, 1
        %s1187 = scalar_lea.sflag [#allocation4], %s1186
        %s1188 = sand.u32 %s231, 1
        %s1189 = smul.addr %s1188, 2
        %s1190 = scalar_lea.vmem [#allocation11], %s1189
        // Predicated region
        $region69: #{tpu_custom_call.1} parent=51 // pred_check
          %p1191 = pneg %p241
        $region70: #{tpu_custom_call.1} parent=51 // pred_check_branch
          %1193 = sbr.rel (%p1191) target = $region72
        $region71: #{tpu_custom_call.1} parent=51 // pred_region
          %s1195 = ssub.s32 32, 32
          %1196 = vsyncadd %s1187, %s1195
          %s1197 = smul.addr %s30, 32
          %s1198 = scalar_lea.hbm %s8, %s1197
          %s1200 = sshll.u32 %s1190, 4
          %s1201 = int_to_ptr.vmem [resolvable:$true] %s1200
          %1203 = dma.vmem_to_hbm [thread:$0]  %s1201, 32, %s1198, %s1187
        $region72: #{tpu_custom_call.1} parent=51 // pred_fallthru
          _
      $region52: #{tpu_custom_call.1} parent=5 // pred_fallthru
        _
      %p1204 = scmp.le.s32.totalorder 2, %s25
      // Predicated region
      $region73: #{tpu_custom_call.1} parent=5 // pred_check
        %p1205 = pneg %p1204
      $region74: #{tpu_custom_call.1} parent=5 // pred_check_branch
        %1207 = sbr.rel (%p1205) target = $region76
      $region75: #{tpu_custom_call.1} parent=5 // pred_region
        %s1208 = ssub.s32 %s25, 2
        // Predicated region
        $region77: #{tpu_custom_call.1} parent=75 // pred_check
          %p1209 = pneg %p247
        $region78: #{tpu_custom_call.1} parent=75 // pred_check_branch
          %1211 = sbr.rel (%p1209) target = $region80
        $region79: #{tpu_custom_call.1} parent=75 // pred_region
          %s1212 = sand.u32 %s232, 1
          %s1213 = scalar_lea.sflag [#allocation4], %s1212
          %s1214 = sand.u32 %s232, 1
          %s1215 = smul.addr %s1214, 2
          %s1216 = scalar_lea.vmem [#allocation11], %s1215
          %1217 = dma.done %s1213, 32
        $region80: #{tpu_custom_call.1} parent=75 // pred_fallthru
          _
      $region76: #{tpu_custom_call.1} parent=5 // pred_fallthru
        _
    $region6: #{tpu_custom_call.1} parent=1 // loop_footer
      %s29 = sadd.s32 1, %s25
    $region7: #{tpu_custom_call.1} parent=1 // loop_footer_branch
      %24 = sbr.rel target = $region3
    $region8: #{tpu_custom_call.1} parent=1 // loop_exit
      _
    %1218 = vsyncpa [#allocation3], 1
    %s1219 = scalar_lea.sflag [#allocation3], 1
    %1220 = vsyncpa %s1219, 1
    %1221 = vsyncpa [#allocation7], 1
    %s1222 = scalar_lea.sflag [#allocation7], 1
    %1223 = vsyncpa %s1222, 1
    %1224 = vsyncpa [#allocation4], 1
    %s1225 = scalar_lea.sflag [#allocation4], 1
    %1226 = vsyncpa %s1225, 1
    %1227 = vsyncpa [#allocation5], 1
    %s1228 = scalar_lea.sflag [#allocation5], 1
    %1229 = vsyncpa %s1228, 1
    %1230 = vsyncpa [#allocation10], 1

</llo_original>
